<compile_context>
chip_gen: v7x
topology: tpu7x:2x2x1
jax: 0.10.0
libtpu: 0.0.40
codegen_flags: <defaults>
</compile_context>

<pallas_src>
import numpy as np
import jax
import jax.numpy as jnp
from jax.experimental import pallas as pl
from jax.experimental.pallas import tpu as pltpu


def get_gaussian_kernel(k=3, mu=0, sigma=1, normalize=True):
    gaussian_1D = np.linspace(-1, 1, k)
    x, y = np.meshgrid(gaussian_1D, gaussian_1D)
    distance = (x ** 2 + y ** 2) ** 0.5
    gaussian_2D = np.exp(-(distance - mu) ** 2 / (2 * sigma ** 2))
    gaussian_2D = gaussian_2D / (2 * np.pi * sigma ** 2)
    if normalize:
        gaussian_2D = gaussian_2D / np.sum(gaussian_2D)
    return gaussian_2D


def _separable_factor(k, mu, sigma, g2d):
    """1D weights w1 with outer(w1, w1) == normalized g2d (exact for mu == 0)."""
    g1 = np.exp(-(np.linspace(-1, 1, k) ** 2) / (2 * sigma ** 2))
    w1 = g1 / np.sum(g1)
    if np.allclose(np.outer(w1, w1), g2d, rtol=1e-9, atol=1e-12):
        return [float(v) for v in w1]
    return None


def _make_blur_kernel(H, W, K, w1d, w2d):
    """Kernel body. Block = (TBC, H*W): one flattened plane per sublane row.

    shifted(v, dr, dc)[i, j] == v[i + dr, j + dc] inside the plane, 0 outside.
    Implemented as a lane roll (the wrap stays inside the same plane row) plus
    an iota border mask, so the 'same' zero padding never touches memory.
    """
    HW = H * W
    r = K // 2

    def kernel(x_ref, o_ref):
        x = x_ref[...].astype(jnp.float32)                        # (TBC, HW)
        pos = jax.lax.broadcasted_iota(jnp.int32, x.shape, 1)     # 0..HW-1 per plane
        if (W & (W - 1)) == 0:                                    # power-of-two width
            col = jnp.bitwise_and(pos, W - 1)
        else:
            col = jax.lax.rem(pos, W)

        def shifted(v, dr, dc):
            s = dr * W + dc
            if s == 0:
                return v
            y = pltpu.roll(v, shift=(-s) % HW, axis=1)            # XLU lane rotate
            conds = []
            if dc > 0:
                conds.append(col < (W - dc))
            elif dc < 0:
                conds.append(col >= (-dc))
            if dr > 0:
                conds.append(pos < (H - dr) * W)                  # row < H - dr
            elif dr < 0:
                conds.append(pos >= (-dr) * W)                    # row >= -dr
            valid = conds[0]
            for c in conds[1:]:
                valid = jnp.logical_and(valid, c)
            return jnp.where(valid, y, 0.0)

        if w1d is not None:
            # Separable Gaussian: horizontal 3-tap then vertical 3-tap (4 rolls).
            h = w1d[r] * x
            for t in range(K):
                if t != r:
                    h = h + w1d[t] * shifted(x, 0, t - r)
            acc = w1d[r] * h
            for t in range(K):
                if t != r:
                    acc = acc + w1d[t] * shifted(h, t - r, 0)
        else:
            # General K*K cross-correlation (PyTorch Conv2d does not flip).
            acc = None
            for ti in range(K):
                for tj in range(K):
                    term = w2d[ti][tj] * shifted(x, ti - r, tj - r)
                    acc = term if acc is None else acc + term

        o_ref[...] = acc.astype(o_ref.dtype)

    return kernel


def _choose_block_planes(N, HW, itemsize, target_buf_bytes=4 << 20):
    """Planes per grid step: fill ~4 MiB per buffer, multiple of 8 (sublane
    tiling) unless we take the whole leading dim."""
    max_planes = max(1, target_buf_bytes // (HW * itemsize))
    if N <= max_planes:
        return N
    if max_planes >= 8:
        return (max_planes // 8) * 8
    # TODO(synk): planes larger than ~4 MiB each would need lane-axis tiling
    # with a halo exchange; not needed at these shapes.
    return min(N, 8)


def blur_filter(img, k_gaussian=3, mu=0, sigma=1):
    """img: (B, C, H, W). Returns the 'same'-padded Gaussian blur, per channel."""
    B, C, H, W = img.shape
    g2d = get_gaussian_kernel(k_gaussian, mu, sigma)          # reference weights
    w1d = _separable_factor(k_gaussian, mu, sigma, g2d)       # None if mu != 0
    w2d = [[float(g2d[i, j]) for j in range(k_gaussian)] for i in range(k_gaussian)]

    N, HW = B * C, H * W
    x2 = img.reshape(N, HW)                                   # free reshape (contiguous)

    TBC = _choose_block_planes(N, HW, x2.dtype.itemsize)
    grid = (pl.cdiv(N, TBC),)

    kernel = _make_blur_kernel(H, W, k_gaussian, w1d, w2d)

    out = pl.pallas_call(
        kernel,
        out_shape=jax.ShapeDtypeStruct((N, HW), img.dtype),
        grid=grid,
        in_specs=[pl.BlockSpec((TBC, HW), lambda i: (i, 0))],
        out_specs=pl.BlockSpec((TBC, HW), lambda i: (i, 0)),
        compiler_params=pltpu.CompilerParams(
            dimension_semantics=("parallel",),
            vmem_limit_bytes=48 * 1024 * 1024,
        ),
    )(x2)

    return out.reshape(B, C, H, W)


if __name__ == "__main__":
    key = jax.random.PRNGKey(0)
    B, C, H, W = 2, 4, 16, 16
    img = jax.random.normal(key, (B, C, H, W), dtype=jnp.float32)

    out = jax.block_until_ready(blur_filter(img))

    # Reference: depthwise "same" conv with the exact reference 2D weights.
    g2d_ref = jnp.asarray(get_gaussian_kernel(3, 0, 1), dtype=jnp.float32)
    w_ref = jnp.broadcast_to(g2d_ref[None, None], (C, 1, 3, 3))
    ref = jax.lax.conv_general_dilated(
        img, w_ref, window_strides=(1, 1), padding="SAME",
        dimension_numbers=("NCHW", "OIHW", "NCHW"), feature_group_count=C,
    )

    assert out.shape == (B, C, H, W) and out.dtype == jnp.float32
    np.testing.assert_allclose(np.asarray(out), np.asarray(ref), rtol=1e-5, atol=1e-5)
    print("KERNEL_OK")
</pallas_src>

<mosaic_0001>
module attributes {stable_mosaic.version = 11 : i64} {
  func.func @kernel(%arg0: i32, %arg1: memref<8x256xf32, #tpu.memory_space<vmem>>, %arg2: memref<8x256xf32, #tpu.memory_space<vmem>>) attributes {dimension_semantics = [#tpu.dimension_semantics<parallel>], iteration_bounds = array<i64: 1>, scalar_prefetch = 0 : i64, scratch_operands = 0 : i64, tpu.core_type = #tpu.core_type<tc>, window_params = [{transform_indices = @transform_0, window_bounds = array<i64: 8, 256>}, {transform_indices = @transform_1, window_bounds = array<i64: 8, 256>}]} {
    %c0 = arith.constant 0 : index
    %c0_0 = arith.constant 0 : index
    %0 = vector.load %arg1[%c0, %c0_0] : memref<8x256xf32, #tpu.memory_space<vmem>>, vector<8x256xf32>
    %1 = tpu.iota {dimensions = array<i32: 1>} : vector<8x256xi32>
    %c15_i32 = arith.constant 15 : i32
    %2 = vector.broadcast %c15_i32 : i32 to vector<8x256xi32>
    %3 = arith.andi %1, %2 : vector<8x256xi32>
    %cst = arith.constant 0.451862752 : f32
    %4 = vector.broadcast %cst : f32 to vector<8x256xf32>
    %5 = arith.mulf %4, %0 : vector<8x256xf32>
    %c1_i32 = arith.constant 1 : i32
    %6 = tpu.dynamic_rotate %0 by %c1_i32 dim 1 : vector<8x256xf32>, i32 -> vector<8x256xf32>
    %c1_i32_1 = arith.constant 1 : i32
    %7 = vector.broadcast %c1_i32_1 : i32 to vector<8x256xi32>
    %8 = arith.cmpi sge, %3, %7 : vector<8x256xi32>
    %cst_2 = arith.constant 0.000000e+00 : f32
    %9 = vector.broadcast %cst_2 : f32 to vector<8x256xf32>
    %10 = arith.select %8, %6, %9 : vector<8x256xi1>, vector<8x256xf32>
    %cst_3 = arith.constant 0.274068624 : f32
    %11 = vector.broadcast %cst_3 : f32 to vector<8x256xf32>
    %12 = arith.mulf %11, %10 : vector<8x256xf32>
    %13 = arith.addf %5, %12 : vector<8x256xf32>
    %c255_i32 = arith.constant 255 : i32
    %14 = tpu.dynamic_rotate %0 by %c255_i32 dim 1 : vector<8x256xf32>, i32 -> vector<8x256xf32>
    %c15_i32_4 = arith.constant 15 : i32
    %15 = vector.broadcast %c15_i32_4 : i32 to vector<8x256xi32>
    %16 = arith.cmpi slt, %3, %15 : vector<8x256xi32>
    %cst_5 = arith.constant 0.000000e+00 : f32
    %17 = vector.broadcast %cst_5 : f32 to vector<8x256xf32>
    %18 = arith.select %16, %14, %17 : vector<8x256xi1>, vector<8x256xf32>
    %cst_6 = arith.constant 0.274068624 : f32
    %19 = vector.broadcast %cst_6 : f32 to vector<8x256xf32>
    %20 = arith.mulf %19, %18 : vector<8x256xf32>
    %21 = arith.addf %13, %20 : vector<8x256xf32>
    %cst_7 = arith.constant 0.451862752 : f32
    %22 = vector.broadcast %cst_7 : f32 to vector<8x256xf32>
    %23 = arith.mulf %22, %21 : vector<8x256xf32>
    %c16_i32 = arith.constant 16 : i32
    %24 = tpu.dynamic_rotate %21 by %c16_i32 dim 1 : vector<8x256xf32>, i32 -> vector<8x256xf32>
    %c16_i32_8 = arith.constant 16 : i32
    %25 = vector.broadcast %c16_i32_8 : i32 to vector<8x256xi32>
    %26 = arith.cmpi sge, %1, %25 : vector<8x256xi32>
    %cst_9 = arith.constant 0.000000e+00 : f32
    %27 = vector.broadcast %cst_9 : f32 to vector<8x256xf32>
    %28 = arith.select %26, %24, %27 : vector<8x256xi1>, vector<8x256xf32>
    %cst_10 = arith.constant 0.274068624 : f32
    %29 = vector.broadcast %cst_10 : f32 to vector<8x256xf32>
    %30 = arith.mulf %29, %28 : vector<8x256xf32>
    %31 = arith.addf %23, %30 : vector<8x256xf32>
    %c240_i32 = arith.constant 240 : i32
    %32 = tpu.dynamic_rotate %21 by %c240_i32 dim 1 : vector<8x256xf32>, i32 -> vector<8x256xf32>
    %c240_i32_11 = arith.constant 240 : i32
    %33 = vector.broadcast %c240_i32_11 : i32 to vector<8x256xi32>
    %34 = arith.cmpi slt, %1, %33 : vector<8x256xi32>
    %cst_12 = arith.constant 0.000000e+00 : f32
    %35 = vector.broadcast %cst_12 : f32 to vector<8x256xf32>
    %36 = arith.select %34, %32, %35 : vector<8x256xi1>, vector<8x256xf32>
    %cst_13 = arith.constant 0.274068624 : f32
    %37 = vector.broadcast %cst_13 : f32 to vector<8x256xf32>
    %38 = arith.mulf %37, %36 : vector<8x256xf32>
    %39 = arith.addf %31, %38 : vector<8x256xf32>
    %c0_14 = arith.constant 0 : index
    %c0_15 = arith.constant 0 : index
    %40 = vector.load %arg2[%c0_14, %c0_15] : memref<8x256xf32, #tpu.memory_space<vmem>>, vector<8x256xf32>
    tpu.vector_store %arg2[%c0_14, %c0_15], %39 {strides = array<i32>} : memref<8x256xf32, #tpu.memory_space<vmem>>, vector<8x256xf32>,
    return
  }
  func.func @transform_0(%arg0: i32) -> (i32, i32) {
    %c0_i32 = arith.constant 0 : i32
    %c0_i32_0 = arith.constant 0 : i32
    return %arg0, %c0_i32 : i32, i32
  }
  func.func @transform_1(%arg0: i32) -> (i32, i32) {
    %c0_i32 = arith.constant 0 : i32
    %c0_i32_0 = arith.constant 0 : i32
    return %arg0, %c0_i32 : i32, i32
  }
}

</mosaic_0001>

<llo_original>
// kernel: tpu_custom_call.1
$region0: #{tpu_custom_call.1}
  #allocation0 [shape = 'u32[]', space=smem, size = 0x4, offset = 0x4, fixed_abs, tag = 'smem constant byte address 0x4 - core index']
  #allocation1 [shape = 'u32[144,128]{1,0:T(1,128)}', space=vmem, size = 0x12000, scoped, tag = 'internal scratch']
  %s0 = inlined_call_operand.hbm [shape: f32[8,256], index: 0, kind: input, shape index: {}]
  %s1 = inlined_call_operand.hbm [shape: f32[8,256], index: 1, kind: output, shape index: {}]
  %s2 = sld [smem:[#allocation0]]
  $region18: #{tpu_custom_call.1} parent=0
    _
  %s4 = ssub.s32 1, %s2
  %s5 = scalar_select 0, %s4, %s2
  $region1: #{tpu_custom_call.1} parent=0
    #allocation2 [shape = 'u8[8192]{0}', space=vmem, size = 0x2000, scoped, tag = 'input window, operand 0, single buffered']
    #allocation3 [shape = 's32[1]{0}', space=sflag, size = 0x4, scoped, tag = 'scoped memory for tpu_custom_call.1']
    #allocation4 [shape = 's32[1]{0}', space=sflag, size = 0x4, scoped, tag = 'scoped memory for tpu_custom_call.1']
    #allocation5 [shape = 'u8[8192]{0}', space=vmem, size = 0x2000, scoped, tag = 'output window, operand 0, single buffered']
    %6 = vsyncpa [#allocation3], 0
    %7 = vsyncpa [#allocation4], 0
    // Predicated region
    $region2: #{tpu_custom_call.1} parent=1 // pred_check
      _
    $region3: #{tpu_custom_call.1} parent=1 // pred_check_branch
      %9 = sbr.rel (0) target = $region5
    $region4: #{tpu_custom_call.1} parent=1 // pred_region
      %s11 = ssub.s32 256, 256
      %12 = vsyncadd [#allocation3], %s11
      %s14 = sshll.u32 [#allocation2], 4
      %s15 = int_to_ptr.vmem [resolvable:$true] %s14
      %17 = dma.hbm_to_vmem [thread:$0]  %s0, 256, %s15, [#allocation3]
    $region5: #{tpu_custom_call.1} parent=1 // pred_fallthru
      _
    // Predicated region
    $region6: #{tpu_custom_call.1} parent=1 // pred_check
      _
    $region7: #{tpu_custom_call.1} parent=1 // pred_check_branch
      %19 = sbr.rel (0) target = $region9
    $region8: #{tpu_custom_call.1} parent=1 // pred_region
      %20 = dma.done [#allocation3], 256
    $region9: #{tpu_custom_call.1} parent=1 // pred_fallthru
      _
    %v21 = vld [vmem:[#allocation2] sm:$0xff]
    %v22 = vld [vmem:[#allocation2 + $0x8] sm:$0xff]
    %v23 = vlaneseq
    %v24 = vand.u32 %v23, 127
    %v25 = vadd.s32 %v24, 128
    %v26 = vand.u32 %v24, 15
    %v27 = vand.u32 %v25, 15
    %v28 = vmul.f32 %v21, 0.45186275
    %v29 = vmul.f32 %v22, 0.45186275
    %30 = vrot.lane.b32.xlu0 %v21, 1
    %v31 = vpop.permute.xlu0 %30
    %32 = vrot.lane.b32.xlu0 %v22, 1
    %v33 = vpop.permute.xlu0 %32
    %vm34 = vcmp.lt.s32.totalorder %v24, 1
    %v35 = vsel %vm34, %v31, %v33
    %v36 = vsel %vm34, %v33, %v31
    %vm37 = vcmp.ge.s32.totalorder %v26, 1
    %vm38 = vcmp.ge.s32.totalorder %v27, 1
    %v39 = vsel %vm37, %v36, 0.0
    %v40 = vsel %vm38, %v35, 0.0
    %v41 = vmul.f32 %v39, 0.27406862
    %v42 = vmul.f32 %v40, 0.27406862
    %v43 = vadd.f32 %v28, %v41
    %v44 = vadd.f32 %v29, %v42
    %45 = vrot.lane.b32.xlu0 %v21, 127
    %v46 = vpop.permute.xlu0 %45
    %47 = vrot.lane.b32.xlu0 %v22, 127
    %v48 = vpop.permute.xlu0 %47
    %vm49 = vcmp.lt.s32.totalorder %v24, 127
    %v50 = vsel %vm49, %v46, %v48
    %v51 = vsel %vm49, %v48, %v46
    %vm52 = vcmp.lt.s32.totalorder %v26, 15
    %vm53 = vcmp.lt.s32.totalorder %v27, 15
    %v54 = vsel %vm52, %v50, 0.0
    %v55 = vsel %vm53, %v51, 0.0
    %v56 = vmul.f32 %v54, 0.27406862
    %v57 = vmul.f32 %v55, 0.27406862
    %v58 = vadd.f32 %v43, %v56
    %v59 = vadd.f32 %v44, %v57
    %v60 = vmul.f32 %v58, 0.45186275
    %v61 = vmul.f32 %v59, 0.45186275
    %62 = vrot.lane.b32.xlu0 %v58, 16
    %v63 = vpop.permute.xlu0 %62
    %64 = vrot.lane.b32.xlu0 %v59, 16
    %v65 = vpop.permute.xlu0 %64
    %vm66 = vcmp.lt.s32.totalorder %v24, 16
    %v67 = vsel %vm66, %v63, %v65
    %v68 = vsel %vm66, %v65, %v63
    %vm69 = vcmp.ge.s32.totalorder %v24, 16
    %vm70 = vcmp.ge.s32.totalorder %v25, 16
    %v71 = vsel %vm69, %v68, 0.0
    %v72 = vsel %vm70, %v67, 0.0
    %v73 = vmul.f32 %v71, 0.27406862
    %v74 = vmul.f32 %v72, 0.27406862
    %v75 = vadd.f32 %v60, %v73
    %v76 = vadd.f32 %v61, %v74
    %77 = vrot.lane.b32.xlu0 %v58, 112
    %v78 = vpop.permute.xlu0 %77
    %79 = vrot.lane.b32.xlu0 %v59, 112
    %v80 = vpop.permute.xlu0 %79
    %vm81 = vcmp.lt.s32.totalorder %v24, 112
    %v82 = vsel %vm81, %v78, %v80
    %v83 = vsel %vm81, %v80, %v78
    %vm84 = vcmp.lt.s32.totalorder %v24, 240
    %vm85 = vcmp.lt.s32.totalorder %v25, 240
    %v86 = vsel %vm84, %v82, 0.0
    %v87 = vsel %vm85, %v83, 0.0
    %v88 = vmul.f32 %v86, 0.27406862
    %v89 = vmul.f32 %v87, 0.27406862
    %v90 = vadd.f32 %v75, %v88
    %v91 = vadd.f32 %v76, %v89
    %92 = vst [vmem:[#allocation5] sm:$0xff] %v90
    %93 = vst [vmem:[#allocation5 + $0x8] sm:$0xff] %v91
    // Predicated region
    $region10: #{tpu_custom_call.1} parent=1 // pred_check
      _
    $region11: #{tpu_custom_call.1} parent=1 // pred_check_branch
      %95 = sbr.rel (0) target = $region13
    $region12: #{tpu_custom_call.1} parent=1 // pred_region
      %s97 = ssub.s32 256, 256
      %98 = vsyncadd [#allocation4], %s97
      %s100 = sshll.u32 [#allocation5], 4
      %s101 = int_to_ptr.vmem [resolvable:$true] %s100
      %103 = dma.vmem_to_hbm [thread:$0]  %s101, 256, %s1, [#allocation4]
    $region13: #{tpu_custom_call.1} parent=1 // pred_fallthru
      _
    // Predicated region
    $region14: #{tpu_custom_call.1} parent=1 // pred_check
      _
    $region15: #{tpu_custom_call.1} parent=1 // pred_check_branch
      %105 = sbr.rel (0) target = $region17
    $region16: #{tpu_custom_call.1} parent=1 // pred_region
      %106 = dma.done [#allocation4], 256
    $region17: #{tpu_custom_call.1} parent=1 // pred_fallthru
      _
    %107 = vsyncpa [#allocation3], 1
    %108 = vsyncpa [#allocation4], 1

</llo_original>
